<compile_context>
chip_gen: v7x
topology: tpu7x:2x2x1
jax: 0.10.0
libtpu: 0.0.40
codegen_flags: <defaults>
</compile_context>

<pallas_src>
import functools

import jax
import jax.numpy as jnp
from jax.experimental import pallas as pl
from jax.experimental.pallas import tpu as pltpu


# ----------------------------------------------------------------------------- kernels
def linear_res_kernel_resident(x_ref, wt_ref, b_ref, o_ref, *, lhs_dtype):
    # x_ref : (tm, W)   input row tile
    # wt_ref: (W, W)    transposed weight (in, out), resident (single-buffered)
    # b_ref : (1, W)    bias row (f32, single-buffered)
    # o_ref : (tm, W)   output row tile
    y = jnp.maximum(x_ref[...].astype(jnp.float32), 0.0)          # ReLU (VPU, f32)
    z = jnp.dot(y.astype(lhs_dtype), wt_ref[...],
                preferred_element_type=jnp.float32)                # MXU, f32 acc
    o_ref[...] = (y + z + b_ref[...]).astype(o_ref.dtype)          # residual + bias


def linear_res_kernel_tiled(x_ref, wt_ref, b_ref, o_ref, acc_ref, *, lhs_dtype):
    # Tiled-weight fallback (large W, e.g. v7x 64 MiB VMEM). tk == tn so the
    # residual slice of relu(x) is exactly the x tile seen at k == j.
    # x_ref : (tm, tk)   wt_ref: (tk, tn)   b_ref: (1, tn)
    # o_ref : (tm, tn)   acc_ref: (tm, tn) f32 scratch
    j = pl.program_id(1)
    k = pl.program_id(2)

    @pl.when(k == 0)
    def _():
        acc_ref[...] = jnp.zeros_like(acc_ref)

    y = jnp.maximum(x_ref[...].astype(jnp.float32), 0.0)
    acc_ref[...] += jnp.dot(y.astype(lhs_dtype), wt_ref[...],
                            preferred_element_type=jnp.float32)

    @pl.when(k == j)                                               # residual columns
    def _():
        acc_ref[...] += y

    @pl.when(k == pl.num_programs(2) - 1)
    def _():
        o_ref[...] = (acc_ref[...] + b_ref[...]).astype(o_ref.dtype)


# ----------------------------------------------------------------------------- sizing
def _round_up(v, m):
    return -(-v // m) * m


def _vmem_plan():
    """Generation-aware (limit, tile-budget) in bytes."""
    try:
        cap = int(pltpu.get_tpu_info().vmem_capacity_bytes)
    except Exception:
        cap = 64 << 20                       # conservative: v7x per-TensorCore VMEM
    vmem_limit = max(cap - (16 << 20), 32 << 20)
    budget = vmem_limit - (4 << 20)
    return vmem_limit, budget


def _choose_tm_resident(n_rows, W, x_bytes, wt_bytes, budget):
    resident = (W * W + W) * wt_bytes + 4 * W        # single-buffered weight + bias
    per_row = 2 * 2 * W * x_bytes                    # double-buffered x + out tiles
    avail = max((budget - resident) // per_row, 8)
    cap = max((4 << 20) // max(W * x_bytes, 1), 8)   # ~4 MiB per x/out buffer
    tm = min(avail, cap, _round_up(n_rows, 8))
    if n_rows >= 16:                                  # >=2 grid steps -> megacore (v7x)
        tm = min(tm, _round_up(-(-n_rows // 2), 8))
    tm = (tm // 256) * 256 if tm >= 256 else (tm // 8) * 8
    return max(int(tm), 8)


def _choose_col_tile(W, wt_bytes, budget):
    if W % 512 == 0 and 2 * 512 * 512 * wt_bytes <= budget // 8:
        return 512
    return 256


def _choose_tm_tiled(n_rows, tn, x_bytes, wt_bytes, budget):
    resident = 2 * tn * tn * wt_bytes + 8 * tn       # weight tiles (dbl-buf) + bias bufs
    per_row = 4 * tn * x_bytes + 4 * tn              # x + out (dbl-buf) + f32 acc
    avail = max((budget - resident) // per_row, 8)
    cap = max((4 << 20) // max(tn * x_bytes, 1), 8)
    tm = min(avail, cap, _round_up(n_rows, 8))
    if n_rows >= 16:
        tm = min(tm, _round_up(-(-n_rows // 2), 8))
    tm = (tm // 256) * 256 if tm >= 256 else (tm // 8) * 8
    return max(int(tm), 8)


# ----------------------------------------------------------------------------- wrapper
def linear_res(x, weight, bias, *, tm=None, tile=None, mxu_dtype="auto",
               force_tiled=False):
    """Forward of Linear_Res: relu(x) + relu(x) @ weight.T + bias.

    x         : [..., W]
    weight    : [W, W]   (out, in) -- PyTorch nn.Linear layout
    bias      : [W]
    tm        : optional row-tile override
    tile      : optional column/K tile for the tiled-weight path (multiple of 128)
    mxu_dtype : "auto" -> bf16 MXU inputs for large W (f32 acc kept); or an explicit
                dtype (e.g. jnp.bfloat16) / None.
    """
    W = x.shape[-1]
    assert weight.shape == (W, W) and bias.shape == (W,)

    orig_shape = x.shape
    x2 = x.reshape(-1, W)
    N = x2.shape[0]

    if mxu_dtype == "auto":
        mxu_dtype = jnp.bfloat16 if W >= 512 else None

    wt_dtype = mxu_dtype if mxu_dtype is not None else x.dtype
    # One-time transpose (+ optional bf16 cast); cache outside the hot path in prod.
    wt = weight.T.astype(wt_dtype)                    # (in, out)
    b2 = bias.reshape(1, W).astype(jnp.float32)

    x_bytes = jnp.dtype(x.dtype).itemsize
    wt_bytes = jnp.dtype(wt_dtype).itemsize
    vmem_limit, budget = _vmem_plan()

    resident_w_bytes = (W * W + W) * wt_bytes
    use_tiled = force_tiled or (resident_w_bytes > budget // 2 and W % 256 == 0)
    # TODO(synk): if W is huge and NOT a multiple of 256, fall back to plain XLA
    # (or pad/cache the weight once outside the hot path) instead of tm=8.

    cost = pl.CostEstimate(
        flops=2 * N * W * W,
        transcendentals=0,
        bytes_accessed=2 * N * W * x_bytes + W * W * wt_bytes + 4 * W,
    )

    if not use_tiled:
        if tm is None:
            tm = _choose_tm_resident(N, W, x_bytes, wt_bytes, budget)
        out = pl.pallas_call(
            functools.partial(linear_res_kernel_resident, lhs_dtype=wt_dtype),
            out_shape=jax.ShapeDtypeStruct((N, W), x.dtype),
            grid_spec=pltpu.PrefetchScalarGridSpec(
                num_scalar_prefetch=0,
                grid=(pl.cdiv(N, tm),),
                in_specs=[
                    pl.BlockSpec((tm, W), lambda i: (i, 0)),            # x row tile
                    pl.BlockSpec((W, W), lambda i: (0, 0),
                                 pipeline_mode=pl.Buffered(1)),         # resident weight
                    pl.BlockSpec((1, W), lambda i: (0, 0),
                                 pipeline_mode=pl.Buffered(1)),         # resident bias
                ],
                out_specs=pl.BlockSpec((tm, W), lambda i: (i, 0)),
            ),
            compiler_params=pltpu.CompilerParams(
                dimension_semantics=("parallel",),
                vmem_limit_bytes=int(vmem_limit)),
            cost_estimate=cost,
        )(x2, wt, b2)
    else:
        tn = tile if tile is not None else _choose_col_tile(W, wt_bytes, budget)
        assert W % tn == 0, "tiled-weight path requires W % tile == 0"
        if tm is None:
            tm = _choose_tm_tiled(N, tn, x_bytes, wt_bytes, budget)
        out = pl.pallas_call(
            functools.partial(linear_res_kernel_tiled, lhs_dtype=wt_dtype),
            out_shape=jax.ShapeDtypeStruct((N, W), x.dtype),
            grid_spec=pltpu.PrefetchScalarGridSpec(
                num_scalar_prefetch=0,
                grid=(pl.cdiv(N, tm), W // tn, W // tn),
                in_specs=[
                    pl.BlockSpec((tm, tn), lambda i, j, k: (i, k)),     # x (rows, K tile)
                    pl.BlockSpec((tn, tn), lambda i, j, k: (k, j)),     # weight tile
                    pl.BlockSpec((1, tn), lambda i, j, k: (0, j)),      # bias tile
                ],
                out_specs=pl.BlockSpec((tm, tn), lambda i, j, k: (i, j)),
                scratch_shapes=[pltpu.VMEM((tm, tn), jnp.float32)],     # f32 accumulator
            ),
            compiler_params=pltpu.CompilerParams(
                dimension_semantics=("parallel", "parallel", "arbitrary"),
                vmem_limit_bytes=int(vmem_limit)),
            cost_estimate=cost,
        )(x2, wt, b2)

    return out.reshape(orig_shape)


def linear_res_ref(x, weight, bias):
    y = jnp.maximum(x, 0.0)
    z = jnp.dot(y, weight.T, precision=jax.lax.Precision.HIGHEST)
    return y + z + bias


# ----------------------------------------------------------------------------- demo
if __name__ == "__main__":
    key = jax.random.PRNGKey(0)
    k_x, k_w, k_b = jax.random.split(key, 3)

    # Small demo shapes: batch of 16 rows, hidden width W = 32.
    N, W = 16, 32
    x = jax.random.normal(k_x, (N, W), dtype=jnp.float32)
    bound = 1.0 / float(W) ** 0.5
    weight = jax.random.uniform(k_w, (W, W), jnp.float32, -bound, bound)
    bias = jax.random.uniform(k_b, (W,), jnp.float32, -bound, bound)
    ref = linear_res_ref(x, weight, bias)

    # 1) Default f32 resident-weight path.
    out = jax.block_until_ready(linear_res(x, weight, bias))
    assert out.shape == (N, W)
    assert jnp.allclose(out, ref, atol=1e-3, rtol=1e-3)

    # 2) bf16 MXU-input path (what large-W production would use), relaxed tolerance.
    out_bf16 = jax.block_until_ready(linear_res(x, weight, bias, mxu_dtype=jnp.bfloat16))
    assert jnp.allclose(out_bf16, ref, atol=1e-1, rtol=5e-2)

    # 3) Tiled-weight fallback (v7x large-W path), forced at a small size to verify.
    N2, W2 = 64, 256
    x2 = jax.random.normal(k_x, (N2, W2), dtype=jnp.float32)
    bound2 = 1.0 / float(W2) ** 0.5
    w2 = jax.random.uniform(k_w, (W2, W2), jnp.float32, -bound2, bound2)
    b2 = jax.random.uniform(k_b, (W2,), jnp.float32, -bound2, bound2)
    out2 = jax.block_until_ready(
        linear_res(x2, w2, b2, force_tiled=True, tile=128, mxu_dtype=None))
    assert jnp.allclose(out2, linear_res_ref(x2, w2, b2), atol=1e-3, rtol=1e-3)

    print("KERNEL_OK")
</pallas_src>

<mosaic_0001>
module attributes {stable_mosaic.version = 11 : i64} {
  func.func @linear_res_kernel_resident(%arg0: i32, %arg1: memref<8x32xf32, #tpu.memory_space<vmem>>, %arg2: memref<32x32xf32, #tpu.memory_space<vmem>>, %arg3: memref<1x32xf32, #tpu.memory_space<vmem>>, %arg4: memref<8x32xf32, #tpu.memory_space<vmem>>) attributes {dimension_semantics = [#tpu.dimension_semantics<parallel>], iteration_bounds = array<i64: 2>, scalar_prefetch = 0 : i64, scratch_operands = 0 : i64, tpu.core_type = #tpu.core_type<tc>, window_params = [{transform_indices = @transform_0, window_bounds = array<i64: 8, 32>}, {pipeline_mode = #tpu.pipeline_mode<synchronous>, transform_indices = @transform_1, window_bounds = array<i64: 32, 32>}, {pipeline_mode = #tpu.pipeline_mode<synchronous>, transform_indices = @transform_2, window_bounds = array<i64: 1, 32>}, {transform_indices = @transform_3, window_bounds = array<i64: 8, 32>}]} {
    %c0 = arith.constant 0 : index
    %c0_0 = arith.constant 0 : index
    %0 = vector.load %arg1[%c0, %c0_0] : memref<8x32xf32, #tpu.memory_space<vmem>>, vector<8x32xf32>
    %cst = arith.constant 0.000000e+00 : f32
    %1 = vector.broadcast %cst : f32 to vector<8x32xf32>
    %2 = arith.maximumf %0, %1 : vector<8x32xf32>
    %c0_1 = arith.constant 0 : index
    %c0_2 = arith.constant 0 : index
    %3 = vector.load %arg2[%c0_1, %c0_2] : memref<32x32xf32, #tpu.memory_space<vmem>>, vector<32x32xf32>
    %cst_3 = arith.constant dense<0.000000e+00> : vector<8x32xf32>
    %4 = tpu.matmul %2, %3, %cst_3 {dimension_numbers = #tpu.dot_dimension_numbers<[1], [0], [0], [1], [0, 0, 1, 1], [], []>} : vector<8x32xf32>, vector<32x32xf32>, vector<8x32xf32> -> vector<8x32xf32>
    %5 = arith.addf %2, %4 : vector<8x32xf32>
    %c0_4 = arith.constant 0 : index
    %c0_5 = arith.constant 0 : index
    %6 = vector.load %arg3[%c0_4, %c0_5] : memref<1x32xf32, #tpu.memory_space<vmem>>, vector<1x32xf32>
    %7 = vector.broadcast %6 : vector<1x32xf32> to vector<8x32xf32>
    %8 = arith.addf %5, %7 : vector<8x32xf32>
    %c0_6 = arith.constant 0 : index
    %c0_7 = arith.constant 0 : index
    %9 = vector.load %arg4[%c0_6, %c0_7] : memref<8x32xf32, #tpu.memory_space<vmem>>, vector<8x32xf32>
    tpu.vector_store %arg4[%c0_6, %c0_7], %8 {strides = array<i32>} : memref<8x32xf32, #tpu.memory_space<vmem>>, vector<8x32xf32>,
    return
  }
  func.func @transform_0(%arg0: i32) -> (i32, i32) {
    %c0_i32 = arith.constant 0 : i32
    %c0_i32_0 = arith.constant 0 : i32
    return %arg0, %c0_i32 : i32, i32
  }
  func.func @transform_1(%arg0: i32) -> (i32, i32) {
    %c0_i32 = arith.constant 0 : i32
    %c0_i32_0 = arith.constant 0 : i32
    %c0_i32_1 = arith.constant 0 : i32
    return %c0_i32, %c0_i32_0 : i32, i32
  }
  func.func @transform_2(%arg0: i32) -> (i32, i32) {
    %c0_i32 = arith.constant 0 : i32
    %c0_i32_0 = arith.constant 0 : i32
    %c0_i32_1 = arith.constant 0 : i32
    return %c0_i32, %c0_i32_0 : i32, i32
  }
  func.func @transform_3(%arg0: i32) -> (i32, i32) {
    %c0_i32 = arith.constant 0 : i32
    %c0_i32_0 = arith.constant 0 : i32
    return %arg0, %c0_i32 : i32, i32
  }
}

</mosaic_0001>

<llo_original>
// kernel: tpu_custom_call.1
$region0: #{tpu_custom_call.1}
  #allocation0 [shape = 'u32[]', space=smem, size = 0x4, offset = 0x4, fixed_abs, tag = 'smem constant byte address 0x4 - core index']
  #allocation1 [shape = 'u32[144,128]{1,0:T(1,128)}', space=vmem, size = 0x12000, scoped, tag = 'internal scratch']
  %s0 = inlined_call_operand.hbm [shape: f32[16,32], index: 0, kind: input, shape index: {}]
  %s1 = inlined_call_operand.hbm [shape: f32[32,32], index: 1, kind: input, shape index: {}]
  %s2 = inlined_call_operand.vmem [shape: f32[1,32], index: 2, kind: input, shape index: {}]
  %s3 = inlined_call_operand.hbm [shape: f32[16,32], index: 3, kind: output, shape index: {}]
  %s4 = sld [smem:[#allocation0]]
  $region53: #{tpu_custom_call.1} parent=0
    _
  %s6 = ssub.s32 1, %s4
  %s7 = scalar_select 0, %s6, %s4
  $region1: #{tpu_custom_call.1} parent=0
    #allocation2 [shape = 'u8[8192]{0}', space=vmem, size = 0x2000, scoped, tag = 'input window, operand 0']
    #allocation3 [shape = 's32[2]{0}', space=sflag, size = 0x8, scoped, tag = 'scoped memory for tpu_custom_call.1']
    #allocation4 [shape = 's32[2]{0}', space=sflag, size = 0x8, scoped, tag = 'scoped memory for tpu_custom_call.1']
    #allocation5 [shape = 'u8[16384]{0}', space=vmem, size = 0x4000, scoped, tag = 'input window, operand 1, single buffered']
    #allocation6 [shape = 's32[1]{0}', space=sflag, size = 0x4, scoped, tag = 'scoped memory for tpu_custom_call.1']
    #allocation7 [shape = 'u8[8192]{0}', space=vmem, size = 0x2000, scoped, tag = 'output window, operand 0']
    %8 = vsyncpa [#allocation3], 0
    %s9 = scalar_lea.sflag [#allocation3], 1
    %10 = vsyncpa %s9, 0
    %11 = vsyncpa [#allocation6], 0
    %12 = vsyncpa [#allocation4], 0
    %s13 = scalar_lea.sflag [#allocation4], 1
    %14 = vsyncpa %s13, 0
    loop: start=0, step=1, limit=4
    $region2: #{tpu_custom_call.1} parent=1 // loop_pre_header
      _
    $region3: #{tpu_custom_call.1} parent=1 // loop_header
      %s16 = sphi 0, %s20
      %p17 = scmp.ge.s32.totalorder %s16, 4
      %s26 = sphi 0, %s28
      %s29 = sphi 0, %s26
      %s30 = sphi 0, %s29
      %s46 = sphi 0, %s30
      %s50 = sphi 0, %s50
      %s52 = sphi 0, %s50
      %s53 = sphi 0, %s52
      %s67 = sphi 0, %s53
      %s71 = sphi 0, %s71
      %s73 = sphi 0, %s71
      %s74 = sphi 0, %s73
      %s88 = sphi 0, %s74
      %s94 = sphi 0, %s96
      %s97 = sphi 0, %s94
      %s98 = sphi 0, %s97
      %s114 = sphi 0, %s98
    $region4: #{tpu_custom_call.1} parent=1 // loop_header_branch
      %19 = sbr.rel (%p17) target = $region8
    $region5: #{tpu_custom_call.1} parent=1 // loop_body
      %s21 = ssub.s32 %s16, 1
      %s22 = ssub.s32 %s16, 2
      %s23 = sadd.s32 %s16, 1
      %s24 = ssub.s32 %s16, %s23
      %p25 = scmp.eq.s32.totalorder %s24, 0
      %s27 = sadd.s32 %s26, 1
      %s28 = scalar_select %p25, %s26, %s27
      %p31 = pneg %p25
      %p32 = scmp.eq.s32.totalorder %s16, 1
      %p33 = por %p31, %p32
      %p34 = scmp.ne.s32.totalorder %s26, %s29
      %p35 = scmp.eq.s32.totalorder %s16, 0
      %p36 = por %p34, %p35
      %p37 = scmp.ne.s32.totalorder %s26, %s29
      %p38 = scmp.eq.s32.totalorder %s21, 1
      %p39 = por %p37, %p38
      %p40 = scmp.ne.s32.totalorder %s29, %s30
      %p41 = scmp.eq.s32.totalorder %s21, 0
      %p42 = por %p40, %p41
      %p43 = scmp.ne.s32.totalorder %s29, %s30
      %p44 = scmp.eq.s32.totalorder %s22, 1
      %p45 = por %p43, %p44
      %p47 = scmp.ne.s32.totalorder %s30, %s46
      %p48 = scmp.eq.s32.totalorder %s22, 0
      %p49 = por %p47, %p48
      %s51 = sadd.s32 %s50, 1
      %p54 = scmp.eq.s32.totalorder %s16, 1
      %p55 = scmp.ne.s32.totalorder %s50, %s52
      %p56 = scmp.eq.s32.totalorder %s16, 0
      %p57 = por %p55, %p56
      %p58 = scmp.ne.s32.totalorder %s50, %s52
      %p59 = scmp.eq.s32.totalorder %s21, 1
      %p60 = por %p58, %p59
      %p61 = scmp.ne.s32.totalorder %s52, %s53
      %p62 = scmp.eq.s32.totalorder %s21, 0
      %p63 = por %p61, %p62
      %p64 = scmp.ne.s32.totalorder %s52, %s53
      %p65 = scmp.eq.s32.totalorder %s22, 1
      %p66 = por %p64, %p65
      %p68 = scmp.ne.s32.totalorder %s53, %s67
      %p69 = scmp.eq.s32.totalorder %s22, 0
      %p70 = por %p68, %p69
      %s72 = sadd.s32 %s71, 1
      %p75 = scmp.eq.s32.totalorder %s16, 1
      %p76 = scmp.ne.s32.totalorder %s71, %s73
      %p77 = scmp.eq.s32.totalorder %s16, 0
      %p78 = por %p76, %p77
      %p79 = scmp.ne.s32.totalorder %s71, %s73
      %p80 = scmp.eq.s32.totalorder %s21, 1
      %p81 = por %p79, %p80
      %p82 = scmp.ne.s32.totalorder %s73, %s74
      %p83 = scmp.eq.s32.totalorder %s21, 0
      %p84 = por %p82, %p83
      %p85 = scmp.ne.s32.totalorder %s73, %s74
      %p86 = scmp.eq.s32.totalorder %s22, 1
      %p87 = por %p85, %p86
      %p89 = scmp.ne.s32.totalorder %s74, %s88
      %p90 = scmp.eq.s32.totalorder %s22, 0
      %p91 = por %p89, %p90
      %s92 = ssub.s32 %s16, %s23
      %p93 = scmp.eq.s32.totalorder %s92, 0
      %s95 = sadd.s32 %s94, 1
      %s96 = scalar_select %p93, %s94, %s95
      %p99 = pneg %p93
      %p100 = scmp.eq.s32.totalorder %s16, 1
      %p101 = por %p99, %p100
      %p102 = scmp.ne.s32.totalorder %s94, %s97
      %p103 = scmp.eq.s32.totalorder %s16, 0
      %p104 = por %p102, %p103
      %p105 = scmp.ne.s32.totalorder %s94, %s97
      %p106 = scmp.eq.s32.totalorder %s21, 1
      %p107 = por %p105, %p106
      %p108 = scmp.ne.s32.totalorder %s97, %s98
      %p109 = scmp.eq.s32.totalorder %s21, 0
      %p110 = por %p108, %p109
      %p111 = scmp.ne.s32.totalorder %s97, %s98
      %p112 = scmp.eq.s32.totalorder %s22, 1
      %p113 = por %p111, %p112
      %p115 = scmp.ne.s32.totalorder %s98, %s114
      %p116 = scmp.eq.s32.totalorder %s22, 0
      %p117 = por %p115, %p116
      %p118 = scmp.le.s32.totalorder 1, %s16
      %p119 = scmp.lt.s32.totalorder %s16, 3
      %p120 = pnand %p118, %p119
      %p121 = pneg %p120
      // Predicated region
      $region9: #{tpu_custom_call.1} parent=5 // pred_check
        _
      $region10: #{tpu_custom_call.1} parent=5 // pred_check_branch
        %123 = sbr.rel (%p120) target = $region12
      $region11: #{tpu_custom_call.1} parent=5 // pred_region
        %s124 = ssub.s32 %s16, 1
        // Predicated region
        $region13: #{tpu_custom_call.1} parent=11 // pred_check
          %p125 = pneg %p63
        $region14: #{tpu_custom_call.1} parent=11 // pred_check_branch
          %127 = sbr.rel (%p125) target = $region16
        $region15: #{tpu_custom_call.1} parent=11 // pred_region
          %s129 = ssub.s32 512, 512
          %130 = vsyncadd [#allocation6], %s129
          %s131 = sshll.u32 [#allocation5], 4
          %s132 = int_to_ptr.vmem [resolvable:$true] %s131
          %137 = dma.hbm_to_vmem [thread:$0]  %s1, 512, %s132, [#allocation6], 128, 128, 8
        $region16: #{tpu_custom_call.1} parent=11 // pred_fallthru
          _
        // Predicated region
        $region17: #{tpu_custom_call.1} parent=11 // pred_check
          %p138 = pneg %p84
        $region18: #{tpu_custom_call.1} parent=11 // pred_check_branch
          %140 = sbr.rel (%p138) target = $region20
        $region19: #{tpu_custom_call.1} parent=11 // pred_region
          _
        $region20: #{tpu_custom_call.1} parent=11 // pred_fallthru
          _
      $region12: #{tpu_custom_call.1} parent=5 // pred_fallthru
        _
      %p141 = scmp.lt.s32.totalorder %s16, 2
      // Predicated region
      $region21: #{tpu_custom_call.1} parent=5 // pred_check
        %p142 = pneg %p141
      $region22: #{tpu_custom_call.1} parent=5 // pred_check_branch
        %144 = sbr.rel (%p142) target = $region24
      $region23: #{tpu_custom_call.1} parent=5 // pred_region
        // Predicated region
        $region25: #{tpu_custom_call.1} parent=23 // pred_check
          %p145 = pneg %p36
        $region26: #{tpu_custom_call.1} parent=23 // pred_check_branch
          %147 = sbr.rel (%p145) target = $region28
        $region27: #{tpu_custom_call.1} parent=23 // pred_region
          %s148 = sand.u32 %s26, 1
          %s149 = scalar_lea.sflag [#allocation3], %s148
          %s150 = sand.u32 %s26, 1
          %s151 = smul.addr %s150, 8
          %s152 = scalar_lea.vmem [#allocation2], %s151
          %s154 = ssub.s32 128, 128
          %155 = vsyncadd %s149, %s154
          %s156 = smul.addr %s16, 128
          %s157 = scalar_lea.hbm %s0, %s156
          %s159 = sshll.u32 %s152, 4
          %s160 = int_to_ptr.vmem [resolvable:$true] %s159
          %162 = dma.hbm_to_vmem [thread:$0]  %s157, 128, %s160, %s149
        $region28: #{tpu_custom_call.1} parent=23 // pred_fallthru
          _
      $region24: #{tpu_custom_call.1} parent=5 // pred_fallthru
        _
      %p163 = scmp.le.s32.totalorder 1, %s16
      %p164 = scmp.lt.s32.totalorder %s16, 3
      %p165 = pnand %p163, %p164
      %p166 = pneg %p165
      // Predicated region
      $region29: #{tpu_custom_call.1} parent=5 // pred_check
        _
      $region30: #{tpu_custom_call.1} parent=5 // pred_check_branch
        %168 = sbr.rel (%p165) target = $region32
      $region31: #{tpu_custom_call.1} parent=5 // pred_region
        %s169 = ssub.s32 %s16, 1
        %s170 = sand.u32 %s29, 1
        %s171 = scalar_lea.sflag [#allocation3], %s170
        %s172 = sand.u32 %s29, 1
        %s173 = smul.addr %s172, 8
        %s174 = scalar_lea.vmem [#allocation2], %s173
        // Predicated region
        $region33: #{tpu_custom_call.1} parent=31 // pred_check
          %p175 = pneg %p42
        $region34: #{tpu_custom_call.1} parent=31 // pred_check_branch
          %177 = sbr.rel (%p175) target = $region36
        $region35: #{tpu_custom_call.1} parent=31 // pred_region
          %178 = dma.done %s171, 128
        $region36: #{tpu_custom_call.1} parent=31 // pred_fallthru
          _
        // Predicated region
        $region37: #{tpu_custom_call.1} parent=31 // pred_check
          %p179 = pneg %p63
        $region38: #{tpu_custom_call.1} parent=31 // pred_check_branch
          %181 = sbr.rel (%p179) target = $region40
        $region39: #{tpu_custom_call.1} parent=31 // pred_region
          %182 = dma.done [#allocation6], 512
        $region40: #{tpu_custom_call.1} parent=31 // pred_fallthru
          _
        %s183 = sand.u32 %s29, 1
        %s184 = scalar_lea.sflag [#allocation3], %s183
        %s185 = sand.u32 %s29, 1
        %s186 = smul.addr %s185, 8
        %s187 = scalar_lea.vmem [#allocation2], %s186
        %p188 = pneg %p42
        %p189 = pneg %p39
        %p190 = pneg %p63
        %p191 = pneg %p60
        %p192 = pneg %p84
        %p193 = pneg %p81
        %p194 = pneg %p110
        %p195 = pneg %p107
        %s196 = sand.u32 %s97, 1
        %s197 = scalar_lea.sflag [#allocation4], %s196
        %s198 = sand.u32 %s97, 1
        %s199 = smul.addr %s198, 8
        %s200 = scalar_lea.vmem [#allocation7], %s199
        %v201 = vld [vmem:[%s174] sm:$0xff]
        %v202 = vmax.f32 %v201, 0.0
        %v203 = vld [vmem:[#allocation5] sm:$0xff]
        %v204 = vld [vmem:[#allocation5 + $0x8] sm:$0xff]
        %v205 = vld [vmem:[#allocation5 + $0x10] sm:$0xff]
        %v206 = vld [vmem:[#allocation5 + $0x18] sm:$0xff]
        %vm207 = vcmask 261120
        %v209 = vsel %vm207, %v202, 0
        %211 = vmatprep.subr.mxu0 0.0
        %212 = vmatpush1.msra.mxu0 %v203
        %213 = vmatprep.subr.mxu0 0.0
        %214 = vmatpush1.msra.mxu0 %v204
        %215 = vmatprep.subr.mxu0 0.0
        %216 = vmatpush1.msra.mxu0 %v205
        %217 = vmatprep.subr.mxu0 0.0
        %218 = vmatpush1.msra.mxu0 %v206
        %219 = vmatprep.subr.mxu0 0.0
        %220 = vmatpush1.msra.mxu0 0.0
        %221 = vmatprep.subr.mxu0 0.0
        %222 = vmatpush1.msra.mxu0 0.0
        %223 = vmatprep.subr.mxu0 0.0
        %224 = vmatpush1.msra.mxu0 0.0
        %225 = vmatprep.subr.mxu0 0.0
        %226 = vmatpush1.msra.mxu0 0.0
        %227 = vmatprep.subr.mxu0 0.0
        %228 = vmatpush1.msra.mxu0 0.0
        %229 = vmatprep.subr.mxu0 0.0
        %230 = vmatpush1.msra.mxu0 0.0
        %231 = vmatprep.subr.mxu0 0.0
        %232 = vmatpush1.msra.mxu0 0.0
        %233 = vmatprep.subr.mxu0 0.0
        %234 = vmatpush1.msra.mxu0 0.0
        %235 = vmatprep.subr.mxu0 0.0
        %236 = vmatpush1.msra.mxu0 0.0
        %237 = vmatprep.subr.mxu0 0.0
        %238 = vmatpush1.msra.mxu0 0.0
        %239 = vmatprep.subr.mxu0 0.0
        %240 = vmatpush1.msra.mxu0 0.0
        %241 = vmatprep.subr.mxu0 0.0
        %242 = vmatpush1.msra.mxu0 0.0
        %243 = vmatprep.subr.mxu0 0.0
        %244 = vmatpush1.msra.mxu0 0.0
        %245 = vmatprep.subr.mxu0 0.0
        %246 = vmatpush1.msra.mxu0 0.0
        %247 = vmatprep.subr.mxu0 0.0
        %248 = vmatpush1.msra.mxu0 0.0
        %249 = vmatprep.subr.mxu0 0.0
        %250 = vmatpush1.msra.mxu0 0.0
        %251 = vmatprep.subr.mxu0 0.0
        %252 = vmatpush1.msra.mxu0 0.0
        %253 = vmatprep.subr.mxu0 0.0
        %254 = vmatpush1.msra.mxu0 0.0
        %255 = vmatprep.subr.mxu0 0.0
        %256 = vmatpush1.msra.mxu0 0.0
        %257 = vmatprep.subr.mxu0 0.0
        %258 = vmatpush1.msra.mxu0 0.0
        %259 = vmatprep.subr.mxu0 0.0
        %260 = vmatpush1.msra.mxu0 0.0
        %261 = vmatprep.subr.mxu0 0.0
        %262 = vmatpush1.msra.mxu0 0.0
        %263 = vmatprep.subr.mxu0 0.0
        %264 = vmatpush1.msra.mxu0 0.0
        %265 = vmatprep.subr.mxu0 0.0
        %266 = vmatpush1.msra.mxu0 0.0
        %267 = vmatprep.subr.mxu0 0.0
        %268 = vmatpush1.msra.mxu0 0.0
        %269 = vmatprep.subr.mxu0 0.0
        %270 = vmatpush1.msra.mxu0 0.0
        %271 = vmatprep.subr.mxu0 0.0
        %272 = vmatpush1.msra.mxu0 0.0
        %273 = vmatprep.subr.mxu0 0.0
        %274 = vmatpush1.msra.mxu0 0.0
        %275 = vmatprep.mubr.f32.mxu0 0.0
        %276 = vmatmul.mubr.f32.gmra.mrb[0].mxu0 %v209
        %v277 = vpop.f32.mrb[0].mxu0
        %v278 = vadd.f32 0.0, %v277
        %v279 = vpop.f32.mrb[0].mxu0
        %280 = vdwg.mxu0
        %v281 = vadd.f32 %v202, %v278
        %v282 = vld [vmem:[%s2] sm:$0x1]
        %v284 = vlaneseq
        %v285 = vshrl.u32 %v284, 7
        %v286 = vsub.s32 0, %v285
        %v287 = vrot.slane %v282, %v286
        %v289 = vadd.f32 %v281, %v287
        %290 = vst.msk [vmem:[%s200] sm:$0xff] %vm207, %v289
        %s291 = sand.u32 %s97, 1
        %s292 = scalar_lea.sflag [#allocation4], %s291
        %s293 = sand.u32 %s97, 1
        %s294 = smul.addr %s293, 8
        %s295 = scalar_lea.vmem [#allocation7], %s294
        // Predicated region
        $region41: #{tpu_custom_call.1} parent=31 // pred_check
          %p296 = pneg %p107
        $region42: #{tpu_custom_call.1} parent=31 // pred_check_branch
          %298 = sbr.rel (%p296) target = $region44
        $region43: #{tpu_custom_call.1} parent=31 // pred_region
          %s300 = ssub.s32 128, 128
          %301 = vsyncadd %s292, %s300
          %s302 = smul.addr %s21, 128
          %s303 = scalar_lea.hbm %s3, %s302
          %s305 = sshll.u32 %s295, 4
          %s306 = int_to_ptr.vmem [resolvable:$true] %s305
          %308 = dma.vmem_to_hbm [thread:$0]  %s306, 128, %s303, %s292
        $region44: #{tpu_custom_call.1} parent=31 // pred_fallthru
          _
      $region32: #{tpu_custom_call.1} parent=5 // pred_fallthru
        _
      %p309 = scmp.le.s32.totalorder 2, %s16
      // Predicated region
      $region45: #{tpu_custom_call.1} parent=5 // pred_check
        %p310 = pneg %p309
      $region46: #{tpu_custom_call.1} parent=5 // pred_check_branch
        %312 = sbr.rel (%p310) target = $region48
      $region47: #{tpu_custom_call.1} parent=5 // pred_region
        %s313 = ssub.s32 %s16, 2
        // Predicated region
        $region49: #{tpu_custom_call.1} parent=47 // pred_check
          %p314 = pneg %p113
        $region50: #{tpu_custom_call.1} parent=47 // pred_check_branch
          %316 = sbr.rel (%p314) target = $region52
        $region51: #{tpu_custom_call.1} parent=47 // pred_region
          %s317 = sand.u32 %s98, 1
          %s318 = scalar_lea.sflag [#allocation4], %s317
          %s319 = sand.u32 %s98, 1
          %s320 = smul.addr %s319, 8
          %s321 = scalar_lea.vmem [#allocation7], %s320
          %322 = dma.done %s318, 128
        $region52: #{tpu_custom_call.1} parent=47 // pred_fallthru
          _
      $region48: #{tpu_custom_call.1} parent=5 // pred_fallthru
        _
    $region6: #{tpu_custom_call.1} parent=1 // loop_footer
      %s20 = sadd.s32 1, %s16
    $region7: #{tpu_custom_call.1} parent=1 // loop_footer_branch
      %15 = sbr.rel target = $region3
    $region8: #{tpu_custom_call.1} parent=1 // loop_exit
      _
    %323 = vsyncpa [#allocation3], 1
    %s324 = scalar_lea.sflag [#allocation3], 1
    %325 = vsyncpa %s324, 1
    %326 = vsyncpa [#allocation6], 1
    %327 = vsyncpa [#allocation4], 1
    %s328 = scalar_lea.sflag [#allocation4], 1
    %329 = vsyncpa %s328, 1

</llo_original>
